<compile_context>
chip_gen: v7x
topology: tpu7x:2x2x1
jax: 0.10.0
libtpu: 0.0.40
codegen_flags: <defaults>
</compile_context>

<pallas_src>
import jax
import jax.numpy as jnp
from jax import lax
from jax.experimental import pallas as pl
from jax.experimental.pallas import tpu as pltpu

# ----------------------------- configuration --------------------------------
B = 2
T = 8
N_NODES = 32            # num_nodes (>= graph_constructor k=20)
C0, C1, C2 = 4, 8, 16   # c[0], c[1], c[2]
KT = 3                  # kt (module hardcodes conv padding=(1,0) -> kt == 3)
GC_DIM = 40             # graph_constructor dim
GC_K = 20               # graph_constructor k
GC_ALPHA = 3.0          # graph_constructor alpha
GCN_DEPTH = 2           # mixprop gdep
GCN_ALPHA = 0.05        # mixprop alpha
SCONV_KS = 3            # spatio_conv_layer ks
LN_EPS = 1e-5

BT = B * T              # 16 (b, t) slices
L = BT * N_NODES        # 512 = lane index l = (b*T + t)*N + n
LG = 128                # lane-group width (vreg lane tile)
NG = L // LG            # 4 lane groups, each holding 4 node blocks

assert N_NODES & (N_NODES - 1) == 0 and T & (T - 1) == 0
N_SHIFT = N_NODES.bit_length() - 1

# packed weight/bias slab layout: (WS_ROWS, WS_COLS), last column = bias
WS_BIAS = SCONV_KS * C1               # 24 weight columns max
WS_COLS = WS_BIAS + 1                 # 25
R_W1 = 0                              # (2*C1, KT*C0) conv1 taps (+GLU residual folded)
R_WM1 = R_W1 + 2 * C1                 # 16: (C1, 3*C1) mixprop-1 mlp
R_WM2 = R_WM1 + C1                    # 24: (C1, 3*C1) mixprop-2 mlp
R_TH = R_WM2 + C1                     # 32: (C1, ks*C1) sconv theta^T
R_W2 = R_TH + C1                      # 40: (C2, KT*C1) conv2 taps (+residual folded)
WS_ROWS = R_W2 + C2                   # 56

# block-diagonal operand slots: each is kron(I_4, 32x32) -> (128, 128)
BD_A1, BD_A2, BD_LK0 = 0, 1, 2
BD_SEG = 2 + SCONV_KS                 # 5: LayerNorm segment-mean block
BD_N = BD_SEG + 1                     # 6


# ------------------------------- kernels ------------------------------------
def _graph_adj_kernel(e1_ref, e2_ref, w1_ref, b1_ref, w2_ref, b2_ref, o_ref):
    """graph_constructor before top-k mask.  Prepare-time only (runs once)."""
    f32 = jnp.float32
    nv1 = jnp.tanh(GC_ALPHA * (jnp.dot(e1_ref[...], w1_ref[...],
                                       preferred_element_type=f32) + b1_ref[...]))
    nv2 = jnp.tanh(GC_ALPHA * (jnp.dot(e2_ref[...], w2_ref[...],
                                       preferred_element_type=f32) + b2_ref[...]))
    dn = (((1,), (1,)), ((), ()))     # contract last dims: A @ B^T
    a = (lax.dot_general(nv1, nv2, dn, preferred_element_type=f32)
         - lax.dot_general(nv2, nv1, dn, preferred_element_type=f32))
    o_ref[...] = jax.nn.relu(jnp.tanh(GC_ALPHA * a))


def _fused_kernel(x_ref, bd_ref, w_ref, lnc_ref, o_ref):
    """Whole st_conv_block2 forward (after adjacency prep) in one body.

    Layout: (C, L) lane-dense, l = (b*T + t)*N + n.  Per-(b,t) node
    contractions use kron(I_4, M) (128x128) blocks on vreg-aligned lane groups.
    """
    f32 = jnp.float32

    def mm(a, b):
        return jnp.dot(a, b, preferred_element_type=f32)

    def nmul(zf, m_bd):
        # out[:, bt*N + w] = sum_v zf[:, bt*N + v] * M[v, w]  (einsum 'ncvl,vw->ncwl')
        return jnp.concatenate(
            [mm(zf[:, g * LG:(g + 1) * LG], m_bd) for g in range(NG)], axis=1)

    # lane -> t bookkeeping for temporal zero padding (shift/and: N, T are 2^k)
    lane = lax.broadcasted_iota(jnp.int32, (1, L), 1)
    t_of = (lane >> N_SHIFT) & (T - 1)
    m_prev = (t_of != 0).astype(f32)         # zero where t == 0
    m_next = (t_of != T - 1).astype(f32)     # zero where t == T - 1

    def taps(z):
        # rows [0:C)=x[t-1], [C:2C)=x[t], [2C:3C)=x[t+1]; XLU roll, zero-padded ends
        zp = pltpu.roll(z, shift=N_NODES, axis=1) * m_prev
        zn = pltpu.roll(z, shift=L - N_NODES, axis=1) * m_next
        return jnp.concatenate([zp, z, zn], axis=0)

    # ---- unpack packed weight/bias slab (static, sublane-aligned row slices) ----
    W = w_ref[...]
    w1c = W[R_W1:R_W1 + 2 * C1, 0:KT * C0]
    b1 = W[R_W1:R_W1 + 2 * C1, WS_BIAS:WS_COLS]
    wm1 = W[R_WM1:R_WM1 + C1, 0:3 * C1]
    bm1 = W[R_WM1:R_WM1 + C1, WS_BIAS:WS_COLS]
    wm2 = W[R_WM2:R_WM2 + C1, 0:3 * C1]
    bm2 = W[R_WM2:R_WM2 + C1, WS_BIAS:WS_COLS]
    tht = W[R_TH:R_TH + C1, 0:SCONV_KS * C1]
    sb = W[R_TH:R_TH + C1, WS_BIAS:WS_COLS]
    w2c = W[R_W2:R_W2 + C2, 0:KT * C1]
    b2 = W[R_W2:R_W2 + C2, WS_BIAS:WS_COLS]

    # ---- temporal_conv_layer #1 (GLU); align() residual folded into weights ----
    c1 = mm(w1c, taps(x_ref[...])) + b1                 # (2*C1, L)
    x1 = c1[:C1] * jax.nn.sigmoid(c1[C1:])              # (C1, L)

    # ---- mixprop(adj) + mixprop(adj^T); adjacencies pre-normalized at prepare ----
    def mixprop(a_bd, wm, bm):
        h1 = GCN_ALPHA * x1 + (1.0 - GCN_ALPHA) * nmul(x1, a_bd)
        h2 = GCN_ALPHA * x1 + (1.0 - GCN_ALPHA) * nmul(h1, a_bd)
        return mm(wm, jnp.concatenate([x1, h1, h2], axis=0)) + bm   # (C1, L)

    xm = mixprop(bd_ref[BD_A1], wm1, bm1) + mixprop(bd_ref[BD_A2], wm2, bm2)

    # ---- spatio_conv_layer: relu(sum_k theta_k^T (x @ Lk_k^T) + b + x) ----------
    xc = jnp.concatenate(
        [nmul(x1, bd_ref[BD_LK0 + k]) for k in range(SCONV_KS)], axis=0)  # (3*C1, L)
    xs = jax.nn.relu(mm(tht, xc) + sb + x1)              # (C1, L)

    x2 = jax.nn.sigmoid(xm) + jnp.tanh(xs)               # (C1, L)

    # ---- temporal_conv_layer #2 (sigmoid); align() residual folded --------------
    x3 = jax.nn.sigmoid(mm(w2c, taps(x2)) + b2)          # (C2, L)

    # ---- nn.LayerNorm([N, C2]) per (b, t): segment stats via block-diag MXU -----
    col = jnp.sum(x3, axis=0, keepdims=True)             # (1, L)
    col2 = jnp.sum(x3 * x3, axis=0, keepdims=True)       # (1, L)
    seg_bd = bd_ref[BD_SEG]                              # kron(I_4, ones(N,N)/(N*C2))
    mean_l = nmul(col, seg_bd)                           # per-lane segment mean
    ex2_l = nmul(col2, seg_bd)                           # per-lane segment E[x^2]
    inv_l = lax.rsqrt(ex2_l - mean_l * mean_l + LN_EPS)
    # lane-dense unmasked (C2, 512) store
    o_ref[...] = (x3 - mean_l) * inv_l * lnc_ref[0] + lnc_ref[1]


# ------------------------------ pallas_call wrappers -------------------------
def _graph_adj_call(e1, e2, w1t, b1, w2t, b2):
    return pl.pallas_call(
        _graph_adj_kernel,
        out_shape=jax.ShapeDtypeStruct((N_NODES, N_NODES), jnp.float32),
    )(e1, e2, w1t, b1, w2t, b2)


def _fused_call(x_flat, bd, wslab, lnc):
    # No grid: single invocation, every operand resident in VMEM (~0.5 MB total).
    return pl.pallas_call(
        _fused_kernel,
        out_shape=jax.ShapeDtypeStruct((C2, L), jnp.float32),
    )(x_flat, bd, wslab, lnc)


# ------------------------------- parameters ----------------------------------
def init_params(key):
    keys = jax.random.split(key, 18)

    def rnd(i, shape, scale=0.1):
        return scale * jax.random.normal(keys[i], shape, dtype=jnp.float32)

    return {
        "emb1": rnd(0, (N_NODES, GC_DIM), 1.0),
        "emb2": rnd(1, (N_NODES, GC_DIM), 1.0),
        "lin1_w": rnd(2, (GC_DIM, GC_DIM)), "lin1_b": rnd(3, (GC_DIM,)),
        "lin2_w": rnd(4, (GC_DIM, GC_DIM)), "lin2_b": rnd(5, (GC_DIM,)),
        "gcn1_w": rnd(6, (C1, (GCN_DEPTH + 1) * C1, 1, 1)), "gcn1_b": rnd(7, (C1,)),
        "gcn2_w": rnd(8, (C1, (GCN_DEPTH + 1) * C1, 1, 1)), "gcn2_b": rnd(9, (C1,)),
        "theta": rnd(10, (C1, C1, SCONV_KS)),
        "sconv_b": rnd(11, (1, C1, 1, 1)),
        "ln_w": 1.0 + rnd(12, (N_NODES, C2)), "ln_b": rnd(13, (N_NODES, C2)),
        "tconv1_w": rnd(14, (2 * C1, C0, KT, 1)), "tconv1_b": rnd(15, (2 * C1,)),
        "tconv2_w": rnd(16, (C2, C1, KT, 1)), "tconv2_b": rnd(17, (C2,)),
    }


# ---------------------- parameter-only precompute (cached) -------------------
def prepare_params(p, lk):
    """Everything that depends on parameters only: graph_constructor adjacency
    (Pallas kernel + top-k mask), mixprop normalization, block-diagonal node
    operands, packed weight/bias slab, LN affine tiling.  Run once, reuse."""
    f32 = jnp.float32

    # graph_constructor (idx = arange(N) -> full embedding tables)
    adj_full = _graph_adj_call(p["emb1"], p["emb2"],
                               p["lin1_w"].T, p["lin1_b"][None, :],
                               p["lin2_w"].T, p["lin2_b"][None, :])
    # torch.topk + scatter_ row mask (index selection kept in JAX glue)
    _, t1 = lax.top_k(adj_full, GC_K)
    mask = jnp.zeros((N_NODES, N_NODES), f32).at[
        jnp.arange(N_NODES)[:, None], t1].set(1.0)
    adj = adj_full * mask

    # mixprop: adj + I, row-normalize (hoisted out of the kernel)
    eye = jnp.eye(N_NODES, dtype=f32)
    a1 = adj + eye
    a1 = a1 / jnp.sum(a1, axis=1, keepdims=True)
    a2 = adj.T + eye
    a2 = a2 / jnp.sum(a2, axis=1, keepdims=True)

    # (128,128) block-diagonal operands: kron(I_4, .) covering one 128-lane group
    i4 = jnp.eye(LG // N_NODES, dtype=f32)
    seg = jnp.ones((N_NODES, N_NODES), f32) / float(C2 * N_NODES)
    bd = jnp.stack([jnp.kron(i4, m) for m in
                    (a1, a2, lk[0].T, lk[1].T, lk[2].T, seg)], axis=0)   # (6,128,128)

    # temporal conv weights: kt taps concatenated + align() residual folded in
    w1 = jnp.transpose(p["tconv1_w"][:, :, :, 0], (0, 2, 1)).reshape(2 * C1, KT * C0)
    w1 = w1.at[jnp.arange(C0), C0 + jnp.arange(C0)].add(1.0)   # GLU: + channel-pad(x)
    w2 = jnp.transpose(p["tconv2_w"][:, :, :, 0], (0, 2, 1)).reshape(C2, KT * C1)
    w2 = w2.at[jnp.arange(C1), C1 + jnp.arange(C1)].add(1.0)   # sigmoid(conv + pad(x))

    tht = jnp.transpose(p["theta"], (1, 2, 0)).reshape(C1, SCONV_KS * C1)

    def row(w, b):   # pad weight to WS_BIAS columns, append bias column
        return jnp.concatenate(
            [jnp.pad(w, ((0, 0), (0, WS_BIAS - w.shape[1]))), b[:, None]], axis=1)

    wslab = jnp.concatenate([
        row(w1, p["tconv1_b"]),
        row(p["gcn1_w"][:, :, 0, 0], p["gcn1_b"]),
        row(p["gcn2_w"][:, :, 0, 0], p["gcn2_b"]),
        row(tht, p["sconv_b"][0, :, 0, 0]),
        row(w2, p["tconv2_b"]),
    ], axis=0)                                                   # (56, 25)
    assert wslab.shape == (WS_ROWS, WS_COLS)

    # LayerNorm affine tiled to the lane-dense layout
    lnc = jnp.stack([jnp.tile(p["ln_w"].T, (1, BT)),
                     jnp.tile(p["ln_b"].T, (1, BT))], axis=0)    # (2, C2, L)

    return {"adj": adj, "bd": bd, "wslab": wslab, "lnc": lnc}


# --------------------------------- forward -----------------------------------
def st_conv_block2_forward(x_nchw, prep):
    """Steady-state forward: input relayout + ONE fused pallas_call."""
    x_flat = jnp.transpose(x_nchw, (1, 0, 2, 3)).reshape(C0, L)   # (C0, B*T*N)
    out_flat = _fused_call(x_flat, prep["bd"], prep["wslab"], prep["lnc"])
    # nn.Dropout: identity in eval mode.
    # TODO(synk): if the consumer accepts the flat (C2, B*T*N) layout, drop this glue.
    out = jnp.transpose(out_flat.reshape(C2, B, T, N_NODES), (1, 0, 2, 3))
    return out, prep["adj"]


# ----------------------------------- main -------------------------------------
if __name__ == "__main__":
    key = jax.random.PRNGKey(0)
    k_x, k_lk, k_p = jax.random.split(key, 3)
    x = jax.random.normal(k_x, (B, C0, T, N_NODES), dtype=jnp.float32)
    lk = 0.1 * jax.random.normal(k_lk, (SCONV_KS, N_NODES, N_NODES), dtype=jnp.float32)
    params = init_params(k_p)

    # Parameter-only work: run once and cache (review item 1).
    prep = jax.jit(prepare_params)(params, lk)
    jax.block_until_ready(prep)

    out, adj = jax.jit(st_conv_block2_forward)(x, prep)
    jax.block_until_ready((out, adj))

    assert out.shape == (B, C2, T, N_NODES)
    assert adj.shape == (N_NODES, N_NODES)
    print("KERNEL_OK")
</pallas_src>

<mosaic_0001>
module attributes {stable_mosaic.version = 11 : i64} {
  func.func @_graph_adj_kernel(%arg0: memref<32x40xf32, #tpu.memory_space<vmem>>, %arg1: memref<32x40xf32, #tpu.memory_space<vmem>>, %arg2: memref<40x40xf32, #tpu.memory_space<vmem>>, %arg3: memref<1x40xf32, #tpu.memory_space<vmem>>, %arg4: memref<40x40xf32, #tpu.memory_space<vmem>>, %arg5: memref<1x40xf32, #tpu.memory_space<vmem>>, %arg6: memref<32x32xf32, #tpu.memory_space<vmem>>) attributes {dimension_semantics = [], scalar_prefetch = 0 : i64, scratch_operands = 0 : i64, tpu.core_type = #tpu.core_type<tc>} {
    %c0 = arith.constant 0 : index
    %c0_0 = arith.constant 0 : index
    %0 = vector.load %arg0[%c0, %c0_0] : memref<32x40xf32, #tpu.memory_space<vmem>>, vector<32x40xf32>
    %c0_1 = arith.constant 0 : index
    %c0_2 = arith.constant 0 : index
    %1 = vector.load %arg2[%c0_1, %c0_2] : memref<40x40xf32, #tpu.memory_space<vmem>>, vector<40x40xf32>
    %cst = arith.constant dense<0.000000e+00> : vector<32x40xf32>
    %2 = tpu.matmul %0, %1, %cst {dimension_numbers = #tpu.dot_dimension_numbers<[1], [0], [0], [1], [0, 0, 1, 1], [], []>} : vector<32x40xf32>, vector<40x40xf32>, vector<32x40xf32> -> vector<32x40xf32>
    %c0_3 = arith.constant 0 : index
    %c0_4 = arith.constant 0 : index
    %3 = vector.load %arg3[%c0_3, %c0_4] : memref<1x40xf32, #tpu.memory_space<vmem>>, vector<1x40xf32>
    %4 = vector.broadcast %3 : vector<1x40xf32> to vector<32x40xf32>
    %5 = arith.addf %2, %4 : vector<32x40xf32>
    %cst_5 = arith.constant 3.000000e+00 : f32
    %6 = vector.broadcast %cst_5 : f32 to vector<32x40xf32>
    %7 = arith.mulf %6, %5 : vector<32x40xf32>
    %8 = math.tanh %7 : vector<32x40xf32>
    %c0_6 = arith.constant 0 : index
    %c0_7 = arith.constant 0 : index
    %9 = vector.load %arg1[%c0_6, %c0_7] : memref<32x40xf32, #tpu.memory_space<vmem>>, vector<32x40xf32>
    %c0_8 = arith.constant 0 : index
    %c0_9 = arith.constant 0 : index
    %10 = vector.load %arg4[%c0_8, %c0_9] : memref<40x40xf32, #tpu.memory_space<vmem>>, vector<40x40xf32>
    %cst_10 = arith.constant dense<0.000000e+00> : vector<32x40xf32>
    %11 = tpu.matmul %9, %10, %cst_10 {dimension_numbers = #tpu.dot_dimension_numbers<[1], [0], [0], [1], [0, 0, 1, 1], [], []>} : vector<32x40xf32>, vector<40x40xf32>, vector<32x40xf32> -> vector<32x40xf32>
    %c0_11 = arith.constant 0 : index
    %c0_12 = arith.constant 0 : index
    %12 = vector.load %arg5[%c0_11, %c0_12] : memref<1x40xf32, #tpu.memory_space<vmem>>, vector<1x40xf32>
    %13 = vector.broadcast %12 : vector<1x40xf32> to vector<32x40xf32>
    %14 = arith.addf %11, %13 : vector<32x40xf32>
    %cst_13 = arith.constant 3.000000e+00 : f32
    %15 = vector.broadcast %cst_13 : f32 to vector<32x40xf32>
    %16 = arith.mulf %15, %14 : vector<32x40xf32>
    %17 = math.tanh %16 : vector<32x40xf32>
    %cst_14 = arith.constant dense<0.000000e+00> : vector<32x32xf32>
    %18 = tpu.matmul %8, %17, %cst_14 {dimension_numbers = #tpu.dot_dimension_numbers<[1], [1], [0], [0], [0, 0, 1, 0], [], []>} : vector<32x40xf32>, vector<32x40xf32>, vector<32x32xf32> -> vector<32x32xf32>
    %cst_15 = arith.constant dense<0.000000e+00> : vector<32x32xf32>
    %19 = tpu.matmul %17, %8, %cst_15 {dimension_numbers = #tpu.dot_dimension_numbers<[1], [1], [0], [0], [0, 0, 1, 0], [], []>} : vector<32x40xf32>, vector<32x40xf32>, vector<32x32xf32> -> vector<32x32xf32>
    %20 = arith.subf %18, %19 : vector<32x32xf32>
    %cst_16 = arith.constant 3.000000e+00 : f32
    %21 = vector.broadcast %cst_16 : f32 to vector<32x32xf32>
    %22 = arith.mulf %21, %20 : vector<32x32xf32>
    %23 = math.tanh %22 : vector<32x32xf32>
    %cst_17 = arith.constant 0.000000e+00 : f32
    %24 = vector.broadcast %cst_17 : f32 to vector<32x32xf32>
    %25 = arith.maximumf %23, %24 : vector<32x32xf32>
    %c0_18 = arith.constant 0 : index
    %c0_19 = arith.constant 0 : index
    %26 = vector.load %arg6[%c0_18, %c0_19] : memref<32x32xf32, #tpu.memory_space<vmem>>, vector<32x32xf32>
    tpu.vector_store %arg6[%c0_18, %c0_19], %25 {strides = array<i32>} : memref<32x32xf32, #tpu.memory_space<vmem>>, vector<32x32xf32>,
    return
  }
}

</mosaic_0001>

<llo_original>
// kernel: prepare_params.1
$region0: #{prepare_params.1}
  #allocation0 [shape = 'u32[]', space=smem, size = 0x4, offset = 0x4, fixed_abs, tag = 'smem constant byte address 0x4 - core index']
  #allocation1 [shape = 'u32[144,128]{1,0:T(1,128)}', space=vmem, size = 0x12000, scoped, tag = 'internal scratch']
  %s0 = inlined_call_operand.vmem [shape: f32[32,40], index: 0, kind: input, shape index: {}]
  %s1 = inlined_call_operand.vmem [shape: f32[32,40], index: 1, kind: input, shape index: {}]
  %s2 = inlined_call_operand.vmem [shape: f32[40,40], index: 2, kind: input, shape index: {}]
  %s3 = inlined_call_operand.vmem [shape: f32[1,40], index: 3, kind: input, shape index: {}]
  %s4 = inlined_call_operand.vmem [shape: f32[40,40], index: 4, kind: input, shape index: {}]
  %s5 = inlined_call_operand.vmem [shape: f32[1,40], index: 5, kind: input, shape index: {}]
  %s6 = inlined_call_operand.vmem [shape: f32[32,32], index: 6, kind: output, shape index: {}]
  %s7 = sld [smem:[#allocation0]]
  $region34: #{prepare_params.1} parent=0
    _
  %s9 = ssub.s32 1, %s7
  %s10 = scalar_select 0, %s9, %s7
  // Predicated region
  $region2: #{prepare_params.1} parent=0 // pred_check
    _
  $region3: #{prepare_params.1} parent=0 // pred_check_branch
    %12 = sbr.rel (0) target = $region5
  $region4: #{prepare_params.1} parent=0 // pred_region
    _
  $region5: #{prepare_params.1} parent=0 // pred_fallthru
    _
  // Predicated region
  $region6: #{prepare_params.1} parent=0 // pred_check
    _
  $region7: #{prepare_params.1} parent=0 // pred_check_branch
    %14 = sbr.rel (0) target = $region9
  $region8: #{prepare_params.1} parent=0 // pred_region
    _
  $region9: #{prepare_params.1} parent=0 // pred_fallthru
    _
  // Predicated region
  $region10: #{prepare_params.1} parent=0 // pred_check
    _
  $region11: #{prepare_params.1} parent=0 // pred_check_branch
    %16 = sbr.rel (0) target = $region13
  $region12: #{prepare_params.1} parent=0 // pred_region
    _
  $region13: #{prepare_params.1} parent=0 // pred_fallthru
    _
  // Predicated region
  $region14: #{prepare_params.1} parent=0 // pred_check
    _
  $region15: #{prepare_params.1} parent=0 // pred_check_branch
    %18 = sbr.rel (0) target = $region17
  $region16: #{prepare_params.1} parent=0 // pred_region
    _
  $region17: #{prepare_params.1} parent=0 // pred_fallthru
    _
  // Predicated region
  $region18: #{prepare_params.1} parent=0 // pred_check
    _
  $region19: #{prepare_params.1} parent=0 // pred_check_branch
    %20 = sbr.rel (0) target = $region21
  $region20: #{prepare_params.1} parent=0 // pred_region
    _
  $region21: #{prepare_params.1} parent=0 // pred_fallthru
    _
  // Predicated region
  $region22: #{prepare_params.1} parent=0 // pred_check
    _
  $region23: #{prepare_params.1} parent=0 // pred_check_branch
    %22 = sbr.rel (0) target = $region25
  $region24: #{prepare_params.1} parent=0 // pred_region
    _
  $region25: #{prepare_params.1} parent=0 // pred_fallthru
    _
  %v23 = vld [vmem:[%s0] sm:$0xff]
  %v24 = vld [vmem:[%s0 + $0x8] sm:$0xff]
  %v25 = vld [vmem:[%s0 + $0x10] sm:$0xff]
  %v26 = vld [vmem:[%s0 + $0x18] sm:$0xff]
  %v27 = vld [vmem:[%s2] sm:$0xff]
  %v28 = vld [vmem:[%s2 + $0x8] sm:$0xff]
  %v29 = vld [vmem:[%s2 + $0x10] sm:$0xff]
  %v30 = vld [vmem:[%s2 + $0x18] sm:$0xff]
  %v31 = vld [vmem:[%s2 + $0x20] sm:$0xff]
  %v32 = vld [vmem:[%s3] sm:$0x1]
  %v34 = vlaneseq
  %v35 = vshrl.u32 %v34, 7
  %v36 = vsub.s32 0, %v35
  %v37 = vrot.slane %v32, %v36
  %vm39 = vcmask 326656
  %v41 = vsel %vm39, %v23, 0
  %v44 = vsel %vm39, %v24, 0
  %v47 = vsel %vm39, %v25, 0
  %v50 = vsel %vm39, %v26, 0
  %52 = vmatprep.subr.mxu0 0.0
  %53 = vmatpush1.msra.mxu0 %v27
  %54 = vmatprep.subr.mxu0 0.0
  %55 = vmatpush1.msra.mxu0 %v28
  %56 = vmatprep.subr.mxu0 0.0
  %57 = vmatpush1.msra.mxu0 %v29
  %58 = vmatprep.subr.mxu0 0.0
  %59 = vmatpush1.msra.mxu0 %v30
  %60 = vmatprep.subr.mxu0 0.0
  %61 = vmatpush1.msra.mxu0 %v31
  %62 = vmatprep.subr.mxu0 0.0
  %63 = vmatpush1.msra.mxu0 0.0
  %64 = vmatprep.subr.mxu0 0.0
  %65 = vmatpush1.msra.mxu0 0.0
  %66 = vmatprep.subr.mxu0 0.0
  %67 = vmatpush1.msra.mxu0 0.0
  %68 = vmatprep.subr.mxu0 0.0
  %69 = vmatpush1.msra.mxu0 0.0
  %70 = vmatprep.subr.mxu0 0.0
  %71 = vmatpush1.msra.mxu0 0.0
  %72 = vmatprep.subr.mxu0 0.0
  %73 = vmatpush1.msra.mxu0 0.0
  %74 = vmatprep.subr.mxu0 0.0
  %75 = vmatpush1.msra.mxu0 0.0
  %76 = vmatprep.subr.mxu0 0.0
  %77 = vmatpush1.msra.mxu0 0.0
  %78 = vmatprep.subr.mxu0 0.0
  %79 = vmatpush1.msra.mxu0 0.0
  %80 = vmatprep.subr.mxu0 0.0
  %81 = vmatpush1.msra.mxu0 0.0
  %82 = vmatprep.subr.mxu0 0.0
  %83 = vmatpush1.msra.mxu0 0.0
  %84 = vmatprep.subr.mxu0 0.0
  %85 = vmatpush1.msra.mxu0 0.0
  %86 = vmatprep.subr.mxu0 0.0
  %87 = vmatpush1.msra.mxu0 0.0
  %88 = vmatprep.subr.mxu0 0.0
  %89 = vmatpush1.msra.mxu0 0.0
  %90 = vmatprep.subr.mxu0 0.0
  %91 = vmatpush1.msra.mxu0 0.0
  %92 = vmatprep.subr.mxu0 0.0
  %93 = vmatpush1.msra.mxu0 0.0
  %94 = vmatprep.subr.mxu0 0.0
  %95 = vmatpush1.msra.mxu0 0.0
  %96 = vmatprep.subr.mxu0 0.0
  %97 = vmatpush1.msra.mxu0 0.0
  %98 = vmatprep.subr.mxu0 0.0
  %99 = vmatpush1.msra.mxu0 0.0
  %100 = vmatprep.subr.mxu0 0.0
  %101 = vmatpush1.msra.mxu0 0.0
  %102 = vmatprep.subr.mxu0 0.0
  %103 = vmatpush1.msra.mxu0 0.0
  %104 = vmatprep.subr.mxu0 0.0
  %105 = vmatpush1.msra.mxu0 0.0
  %106 = vmatprep.subr.mxu0 0.0
  %107 = vmatpush1.msra.mxu0 0.0
  %108 = vmatprep.subr.mxu0 0.0
  %109 = vmatpush1.msra.mxu0 0.0
  %110 = vmatprep.subr.mxu0 0.0
  %111 = vmatpush1.msra.mxu0 0.0
  %112 = vmatprep.subr.mxu0 0.0
  %113 = vmatpush1.msra.mxu0 0.0
  %114 = vmatprep.subr.mxu0 0.0
  %115 = vmatpush1.msra.mxu0 0.0
  %116 = vmatprep.mubr.f32.mxu0 0.0
  %117 = vmatmul.mubr.f32.gmra.mrb[0].mxu0 %v41
  %v118 = vpop.f32.mrb[0].mxu0
  %v119 = vadd.f32 %v37, %v118
  %v120 = vpop.f32.mrb[0].mxu0
  %121 = vmatprep.mubr.f32.mxu0 0.0
  %122 = vmatmul.mubr.f32.gmra.mrb[0].mxu0 %v44
  %v123 = vpop.f32.mrb[0].mxu0
  %v124 = vadd.f32 %v37, %v123
  %v125 = vpop.f32.mrb[0].mxu0
  %126 = vmatprep.mubr.f32.mxu0 0.0
  %127 = vmatmul.mubr.f32.gmra.mrb[0].mxu0 %v47
  %v128 = vpop.f32.mrb[0].mxu0
  %v129 = vadd.f32 %v37, %v128
  %v130 = vpop.f32.mrb[0].mxu0
  %131 = vmatprep.mubr.f32.mxu0 0.0
  %132 = vmatmul.mubr.f32.gmra.mrb[0].mxu0 %v50
  %v133 = vpop.f32.mrb[0].mxu0
  %v134 = vadd.f32 %v37, %v133
  %v135 = vpop.f32.mrb[0].mxu0
  %136 = vdwg.mxu0
  %v137 = vmul.f32 %v119, 3.0
  %v138 = vmul.f32 %v124, 3.0
  %v139 = vmul.f32 %v129, 3.0
  %v140 = vmul.f32 %v134, 3.0
  %v141 = vtanh.pop %v137
  %v142 = vtanh.pop %v138
  %v143 = vtanh.pop %v139
  %v144 = vtanh.pop %v140
  %v145 = vld [vmem:[%s1] sm:$0xff]
  %v146 = vld [vmem:[%s1 + $0x8] sm:$0xff]
  %v147 = vld [vmem:[%s1 + $0x10] sm:$0xff]
  %v148 = vld [vmem:[%s1 + $0x18] sm:$0xff]
  %v149 = vld [vmem:[%s4] sm:$0xff]
  %v150 = vld [vmem:[%s4 + $0x8] sm:$0xff]
  %v151 = vld [vmem:[%s4 + $0x10] sm:$0xff]
  %v152 = vld [vmem:[%s4 + $0x18] sm:$0xff]
  %v153 = vld [vmem:[%s4 + $0x20] sm:$0xff]
  %v154 = vld [vmem:[%s5] sm:$0x1]
  %v156 = vlaneseq
  %v157 = vshrl.u32 %v156, 7
  %v158 = vsub.s32 0, %v157
  %v159 = vrot.slane %v154, %v158
  %v162 = vsel %vm39, %v145, 0
  %v165 = vsel %vm39, %v146, 0
  %v168 = vsel %vm39, %v147, 0
  %v171 = vsel %vm39, %v148, 0
  %173 = vmatprep.subr.mxu0 0.0
  %174 = vmatpush1.msra.mxu0 %v149
  %175 = vmatprep.subr.mxu0 0.0
  %176 = vmatpush1.msra.mxu0 %v150
  %177 = vmatprep.subr.mxu0 0.0
  %178 = vmatpush1.msra.mxu0 %v151
  %179 = vmatprep.subr.mxu0 0.0
  %180 = vmatpush1.msra.mxu0 %v152
  %181 = vmatprep.subr.mxu0 0.0
  %182 = vmatpush1.msra.mxu0 %v153
  %183 = vmatprep.subr.mxu0 0.0
  %184 = vmatpush1.msra.mxu0 0.0
  %185 = vmatprep.subr.mxu0 0.0
  %186 = vmatpush1.msra.mxu0 0.0
  %187 = vmatprep.subr.mxu0 0.0
  %188 = vmatpush1.msra.mxu0 0.0
  %189 = vmatprep.subr.mxu0 0.0
  %190 = vmatpush1.msra.mxu0 0.0
  %191 = vmatprep.subr.mxu0 0.0
  %192 = vmatpush1.msra.mxu0 0.0
  %193 = vmatprep.subr.mxu0 0.0
  %194 = vmatpush1.msra.mxu0 0.0
  %195 = vmatprep.subr.mxu0 0.0
  %196 = vmatpush1.msra.mxu0 0.0
  %197 = vmatprep.subr.mxu0 0.0
  %198 = vmatpush1.msra.mxu0 0.0
  %199 = vmatprep.subr.mxu0 0.0
  %200 = vmatpush1.msra.mxu0 0.0
  %201 = vmatprep.subr.mxu0 0.0
  %202 = vmatpush1.msra.mxu0 0.0
  %203 = vmatprep.subr.mxu0 0.0
  %204 = vmatpush1.msra.mxu0 0.0
  %205 = vmatprep.subr.mxu0 0.0
  %206 = vmatpush1.msra.mxu0 0.0
  %207 = vmatprep.subr.mxu0 0.0
  %208 = vmatpush1.msra.mxu0 0.0
  %209 = vmatprep.subr.mxu0 0.0
  %210 = vmatpush1.msra.mxu0 0.0
  %211 = vmatprep.subr.mxu0 0.0
  %212 = vmatpush1.msra.mxu0 0.0
  %213 = vmatprep.subr.mxu0 0.0
  %214 = vmatpush1.msra.mxu0 0.0
  %215 = vmatprep.subr.mxu0 0.0
  %216 = vmatpush1.msra.mxu0 0.0
  %217 = vmatprep.subr.mxu0 0.0
  %218 = vmatpush1.msra.mxu0 0.0
  %219 = vmatprep.subr.mxu0 0.0
  %220 = vmatpush1.msra.mxu0 0.0
  %221 = vmatprep.subr.mxu0 0.0
  %222 = vmatpush1.msra.mxu0 0.0
  %223 = vmatprep.subr.mxu0 0.0
  %224 = vmatpush1.msra.mxu0 0.0
  %225 = vmatprep.subr.mxu0 0.0
  %226 = vmatpush1.msra.mxu0 0.0
  %227 = vmatprep.subr.mxu0 0.0
  %228 = vmatpush1.msra.mxu0 0.0
  %229 = vmatprep.subr.mxu0 0.0
  %230 = vmatpush1.msra.mxu0 0.0
  %231 = vmatprep.subr.mxu0 0.0
  %232 = vmatpush1.msra.mxu0 0.0
  %233 = vmatprep.subr.mxu0 0.0
  %234 = vmatpush1.msra.mxu0 0.0
  %235 = vmatprep.subr.mxu0 0.0
  %236 = vmatpush1.msra.mxu0 0.0
  %237 = vmatprep.mubr.f32.mxu0 0.0
  %238 = vmatmul.mubr.f32.gmra.mrb[0].mxu0 %v162
  %v239 = vpop.f32.mrb[0].mxu0
  %v240 = vadd.f32 %v159, %v239
  %v241 = vpop.f32.mrb[0].mxu0
  %242 = vmatprep.mubr.f32.mxu0 0.0
  %243 = vmatmul.mubr.f32.gmra.mrb[0].mxu0 %v165
  %v244 = vpop.f32.mrb[0].mxu0
  %v245 = vadd.f32 %v159, %v244
  %v246 = vpop.f32.mrb[0].mxu0
  %247 = vmatprep.mubr.f32.mxu0 0.0
  %248 = vmatmul.mubr.f32.gmra.mrb[0].mxu0 %v168
  %v249 = vpop.f32.mrb[0].mxu0
  %v250 = vadd.f32 %v159, %v249
  %v251 = vpop.f32.mrb[0].mxu0
  %252 = vmatprep.mubr.f32.mxu0 0.0
  %253 = vmatmul.mubr.f32.gmra.mrb[0].mxu0 %v171
  %v254 = vpop.f32.mrb[0].mxu0
  %v255 = vadd.f32 %v159, %v254
  %v256 = vpop.f32.mrb[0].mxu0
  %257 = vdwg.mxu0
  %v258 = vmul.f32 %v240, 3.0
  %v259 = vmul.f32 %v245, 3.0
  %v260 = vmul.f32 %v250, 3.0
  %v261 = vmul.f32 %v255, 3.0
  %v262 = vtanh.pop %v258
  %v263 = vtanh.pop %v259
  %v264 = vtanh.pop %v260
  %v265 = vtanh.pop %v261
  %v267 = vsel %vm39, %v141, 0
  %v270 = vsel %vm39, %v142, 0
  %v273 = vsel %vm39, %v143, 0
  %v276 = vsel %vm39, %v144, 0
  %v279 = vsel %vm39, %v262, 0
  %v282 = vsel %vm39, %v263, 0
  %v285 = vsel %vm39, %v264, 0
  %v288 = vsel %vm39, %v265, 0
  %290 = vmatprep.subr.mxu0 0.0
  %291 = vmatpush1.xpose.msra.mxu0 %v279
  %292 = vmatprep.subr.mxu0 0.0
  %293 = vmatpush1.xpose.msra.mxu0 %v282
  %294 = vmatprep.subr.mxu0 0.0
  %295 = vmatpush1.xpose.msra.mxu0 %v285
  %296 = vmatprep.subr.mxu0 0.0
  %297 = vmatpush1.xpose.msra.mxu0 %v288
  %298 = vmatprep.subr.mxu0 0.0
  %299 = vmatpush1.xpose.msra.mxu0 0.0
  %300 = vmatprep.subr.mxu0 0.0
  %301 = vmatpush1.xpose.msra.mxu0 0.0
  %302 = vmatprep.subr.mxu0 0.0
  %303 = vmatpush1.xpose.msra.mxu0 0.0
  %304 = vmatprep.subr.mxu0 0.0
  %305 = vmatpush1.xpose.msra.mxu0 0.0
  %306 = vmatprep.subr.mxu0 0.0
  %307 = vmatpush1.xpose.msra.mxu0 0.0
  %308 = vmatprep.subr.mxu0 0.0
  %309 = vmatpush1.xpose.msra.mxu0 0.0
  %310 = vmatprep.subr.mxu0 0.0
  %311 = vmatpush1.xpose.msra.mxu0 0.0
  %312 = vmatprep.subr.mxu0 0.0
  %313 = vmatpush1.xpose.msra.mxu0 0.0
  %314 = vmatprep.subr.mxu0 0.0
  %315 = vmatpush1.xpose.msra.mxu0 0.0
  %316 = vmatprep.subr.mxu0 0.0
  %317 = vmatpush1.xpose.msra.mxu0 0.0
  %318 = vmatprep.subr.mxu0 0.0
  %319 = vmatpush1.xpose.msra.mxu0 0.0
  %320 = vmatprep.subr.mxu0 0.0
  %321 = vmatpush1.xpose.msra.mxu0 0.0
  %322 = vmatprep.subr.mxu0 0.0
  %323 = vmatpush1.xpose.msra.mxu0 0.0
  %324 = vmatprep.subr.mxu0 0.0
  %325 = vmatpush1.xpose.msra.mxu0 0.0
  %326 = vmatprep.subr.mxu0 0.0
  %327 = vmatpush1.xpose.msra.mxu0 0.0
  %328 = vmatprep.subr.mxu0 0.0
  %329 = vmatpush1.xpose.msra.mxu0 0.0
  %330 = vmatprep.subr.mxu0 0.0
  %331 = vmatpush1.xpose.msra.mxu0 0.0
  %332 = vmatprep.subr.mxu0 0.0
  %333 = vmatpush1.xpose.msra.mxu0 0.0
  %334 = vmatprep.subr.mxu0 0.0
  %335 = vmatpush1.xpose.msra.mxu0 0.0
  %336 = vmatprep.subr.mxu0 0.0
  %337 = vmatpush1.xpose.msra.mxu0 0.0
  %338 = vmatprep.subr.mxu0 0.0
  %339 = vmatpush1.xpose.msra.mxu0 0.0
  %340 = vmatprep.subr.mxu0 0.0
  %341 = vmatpush1.xpose.msra.mxu0 0.0
  %342 = vmatprep.subr.mxu0 0.0
  %343 = vmatpush1.xpose.msra.mxu0 0.0
  %344 = vmatprep.subr.mxu0 0.0
  %345 = vmatpush1.xpose.msra.mxu0 0.0
  %346 = vmatprep.subr.mxu0 0.0
  %347 = vmatpush1.xpose.msra.mxu0 0.0
  %348 = vmatprep.subr.mxu0 0.0
  %349 = vmatpush1.xpose.msra.mxu0 0.0
  %350 = vmatprep.subr.mxu0 0.0
  %351 = vmatpush1.xpose.msra.mxu0 0.0
  %352 = vmatprep.subr.mxu0 0.0
  %353 = vmatpush1.xpose.msra.mxu0 0.0
  %354 = vmatprep.mubr.f32.mxu0 0.0
  %355 = vmatmul.mubr.f32.gmra.mrb[0].mxu0 %v267
  %v356 = vpop.f32.mrb[0].mxu0
  %v357 = vadd.f32 0.0, %v356
  %v358 = vpop.f32.mrb[0].mxu0
  %359 = vmatprep.mubr.f32.mxu0 0.0
  %360 = vmatmul.mubr.f32.gmra.mrb[0].mxu0 %v270
  %v361 = vpop.f32.mrb[0].mxu0
  %v362 = vadd.f32 0.0, %v361
  %v363 = vpop.f32.mrb[0].mxu0
  %364 = vmatprep.mubr.f32.mxu0 0.0
  %365 = vmatmul.mubr.f32.gmra.mrb[0].mxu0 %v273
  %v366 = vpop.f32.mrb[0].mxu0
  %v367 = vadd.f32 0.0, %v366
  %v368 = vpop.f32.mrb[0].mxu0
  %369 = vmatprep.mubr.f32.mxu0 0.0
  %370 = vmatmul.mubr.f32.gmra.mrb[0].mxu0 %v276
  %v371 = vpop.f32.mrb[0].mxu0
  %v372 = vadd.f32 0.0, %v371
  %v373 = vpop.f32.mrb[0].mxu0
  %374 = vdwg.mxu0
  %375 = vmatprep.subr.mxu0 0.0
  %376 = vmatpush1.xpose.msra.mxu0 %v267
  %377 = vmatprep.subr.mxu0 0.0
  %378 = vmatpush1.xpose.msra.mxu0 %v270
  %379 = vmatprep.subr.mxu0 0.0
  %380 = vmatpush1.xpose.msra.mxu0 %v273
  %381 = vmatprep.subr.mxu0 0.0
  %382 = vmatpush1.xpose.msra.mxu0 %v276
  %383 = vmatprep.subr.mxu0 0.0
  %384 = vmatpush1.xpose.msra.mxu0 0.0
  %385 = vmatprep.subr.mxu0 0.0
  %386 = vmatpush1.xpose.msra.mxu0 0.0
  %387 = vmatprep.subr.mxu0 0.0
  %388 = vmatpush1.xpose.msra.mxu0 0.0
  %389 = vmatprep.subr.mxu0 0.0
  %390 = vmatpush1.xpose.msra.mxu0 0.0
  %391 = vmatprep.subr.mxu0 0.0
  %392 = vmatpush1.xpose.msra.mxu0 0.0
  %393 = vmatprep.subr.mxu0 0.0
  %394 = vmatpush1.xpose.msra.mxu0 0.0
  %395 = vmatprep.subr.mxu0 0.0
  %396 = vmatpush1.xpose.msra.mxu0 0.0
  %397 = vmatprep.subr.mxu0 0.0
  %398 = vmatpush1.xpose.msra.mxu0 0.0
  %399 = vmatprep.subr.mxu0 0.0
  %400 = vmatpush1.xpose.msra.mxu0 0.0
  %401 = vmatprep.subr.mxu0 0.0
  %402 = vmatpush1.xpose.msra.mxu0 0.0
  %403 = vmatprep.subr.mxu0 0.0
  %404 = vmatpush1.xpose.msra.mxu0 0.0
  %405 = vmatprep.subr.mxu0 0.0
  %406 = vmatpush1.xpose.msra.mxu0 0.0
  %407 = vmatprep.subr.mxu0 0.0
  %408 = vmatpush1.xpose.msra.mxu0 0.0
  %409 = vmatprep.subr.mxu0 0.0
  %410 = vmatpush1.xpose.msra.mxu0 0.0
  %411 = vmatprep.subr.mxu0 0.0
  %412 = vmatpush1.xpose.msra.mxu0 0.0
  %413 = vmatprep.subr.mxu0 0.0
  %414 = vmatpush1.xpose.msra.mxu0 0.0
  %415 = vmatprep.subr.mxu0 0.0
  %416 = vmatpush1.xpose.msra.mxu0 0.0
  %417 = vmatprep.subr.mxu0 0.0
  %418 = vmatpush1.xpose.msra.mxu0 0.0
  %419 = vmatprep.subr.mxu0 0.0
  %420 = vmatpush1.xpose.msra.mxu0 0.0
  %421 = vmatprep.subr.mxu0 0.0
  %422 = vmatpush1.xpose.msra.mxu0 0.0
  %423 = vmatprep.subr.mxu0 0.0
  %424 = vmatpush1.xpose.msra.mxu0 0.0
  %425 = vmatprep.subr.mxu0 0.0
  %426 = vmatpush1.xpose.msra.mxu0 0.0
  %427 = vmatprep.subr.mxu0 0.0
  %428 = vmatpush1.xpose.msra.mxu0 0.0
  %429 = vmatprep.subr.mxu0 0.0
  %430 = vmatpush1.xpose.msra.mxu0 0.0
  %431 = vmatprep.subr.mxu0 0.0
  %432 = vmatpush1.xpose.msra.mxu0 0.0
  %433 = vmatprep.subr.mxu0 0.0
  %434 = vmatpush1.xpose.msra.mxu0 0.0
  %435 = vmatprep.subr.mxu0 0.0
  %436 = vmatpush1.xpose.msra.mxu0 0.0
  %437 = vmatprep.subr.mxu0 0.0
  %438 = vmatpush1.xpose.msra.mxu0 0.0
  %439 = vmatprep.mubr.f32.mxu0 0.0
  %440 = vmatmul.mubr.f32.gmra.mrb[0].mxu0 %v279
  %v441 = vpop.f32.mrb[0].mxu0
  %v442 = vadd.f32 0.0, %v441
  %v443 = vpop.f32.mrb[0].mxu0
  %444 = vmatprep.mubr.f32.mxu0 0.0
  %445 = vmatmul.mubr.f32.gmra.mrb[0].mxu0 %v282
  %v446 = vpop.f32.mrb[0].mxu0
  %v447 = vadd.f32 0.0, %v446
  %v448 = vpop.f32.mrb[0].mxu0
  %449 = vmatprep.mubr.f32.mxu0 0.0
  %450 = vmatmul.mubr.f32.gmra.mrb[0].mxu0 %v285
  %v451 = vpop.f32.mrb[0].mxu0
  %v452 = vadd.f32 0.0, %v451
  %v453 = vpop.f32.mrb[0].mxu0
  %454 = vmatprep.mubr.f32.mxu0 0.0
  %455 = vmatmul.mubr.f32.gmra.mrb[0].mxu0 %v288
  %v456 = vpop.f32.mrb[0].mxu0
  %v457 = vadd.f32 0.0, %v456
  %v458 = vpop.f32.mrb[0].mxu0
  %459 = vdwg.mxu0
  %v460 = vsub.f32 %v357, %v442
  %v461 = vsub.f32 %v362, %v447
  %v462 = vsub.f32 %v367, %v452
  %v463 = vsub.f32 %v372, %v457
  %v464 = vmul.f32 %v460, 3.0
  %v465 = vmul.f32 %v461, 3.0
  %v466 = vmul.f32 %v462, 3.0
  %v467 = vmul.f32 %v463, 3.0
  %v468 = vtanh.pop %v464
  %v469 = vtanh.pop %v465
  %v470 = vtanh.pop %v466
  %v471 = vtanh.pop %v467
  %v472 = vmax.f32 %v468, 0.0
  %v473 = vmax.f32 %v469, 0.0
  %v474 = vmax.f32 %v470, 0.0
  %v475 = vmax.f32 %v471, 0.0
  %vm476 = vcmask 261120
  %477 = vst.msk [vmem:[%s6] sm:$0xff] %vm476, %v472
  %478 = vst.msk [vmem:[%s6 + $0x8] sm:$0xff] %vm476, %v473
  %479 = vst.msk [vmem:[%s6 + $0x10] sm:$0xff] %vm476, %v474
  %480 = vst.msk [vmem:[%s6 + $0x18] sm:$0xff] %vm476, %v475
  // Predicated region
  $region26: #{prepare_params.1} parent=0 // pred_check
    _
  $region27: #{prepare_params.1} parent=0 // pred_check_branch
    %482 = sbr.rel (0) target = $region29
  $region28: #{prepare_params.1} parent=0 // pred_region
    _
  $region29: #{prepare_params.1} parent=0 // pred_fallthru
    _
  // Predicated region
  $region30: #{prepare_params.1} parent=0 // pred_check
    _
  $region31: #{prepare_params.1} parent=0 // pred_check_branch
    %484 = sbr.rel (0) target = $region33
  $region32: #{prepare_params.1} parent=0 // pred_region
    _
  $region33: #{prepare_params.1} parent=0 // pred_fallthru
    _

</llo_original>
